<compile_context>
chip_gen: v7x
topology: tpu7x:2x2x1
jax: 0.10.0
libtpu: 0.0.40
codegen_flags: <defaults>
</compile_context>

<pallas_src>
import functools

import jax
import jax.numpy as jnp
import numpy as np
from jax.experimental import pallas as pl
from jax.experimental.pallas import tpu as pltpu


def _embed_ln_kernel(ids_ref,                         # scalar prefetch (SMEM): flat ids (B*S_pad,)
                     w_hbm, pos_ref, g_ref, beta_ref,  # inputs (HBM, VMEM, VMEM, VMEM)
                     o_ref,                            # output block (1, tb, D)
                     wbuf, sem,                        # scratch: (2, tb, D) word rows + DMA sems
                     *, eps, tb, s_pad):
    b = pl.program_id(0)
    j = pl.program_id(1)
    ns = pl.num_programs(1)

    def issue_word_gather(jj, slot):
        # Flat token index of the first row of tile (b, jj); multiple of 8 by
        # construction (s_pad and tb are multiples of 8).
        base = pl.multiple_of(b * s_pad + jj * tb, 8)

        @pl.loop(0, tb // 8)
        def _(u):
            r0 = u * 8
            for c in range(8):                 # unrolled x8: co-issue scalar/misc work
                r = r0 + c
                tok = ids_ref[base + r]
                pltpu.make_async_copy(
                    w_hbm.at[pl.ds(tok, 1), :],
                    wbuf.at[slot, pl.ds(r, 1), :],
                    sem.at[slot],
                ).start()

    # Prime this batch row's pipeline (each row is self-contained, so the
    # batch axis carries no cross-step state and can be split across cores).
    @pl.when(j == 0)
    def _():
        issue_word_gather(0, 0)

    # Prefetch the next seq tile of this row before waiting on the current one.
    @pl.when(j + 1 < ns)
    def _():
        issue_word_gather(j + 1, (j + 1) % 2)

    slot = j % 2

    # ONE bulk wait for the whole slot: the descriptor below covers (tb, D),
    # i.e. exactly the byte count of the tb row copies started for this slot
    # (the DMA semaphore counts bytes), replacing tb individual waits.
    pltpu.make_async_copy(
        w_hbm.at[pl.ds(0, tb), :], wbuf.at[slot], sem.at[slot]).wait()

    # Dense (tb, D) math in f32.  Position block arrives via the auto-pipeline.
    x = wbuf[slot].astype(jnp.float32) + pos_ref[...].astype(jnp.float32)
    mean = jnp.mean(x, axis=-1, keepdims=True)
    var = jnp.maximum(jnp.mean(x * x, axis=-1, keepdims=True) - mean * mean, 0.0)
    inv = jax.lax.rsqrt(var + eps)
    g = g_ref[...].astype(jnp.float32)        # (1, D) broadcasts over (tb, D)
    bt = beta_ref[...].astype(jnp.float32)
    o_ref[0] = (((x - mean) * inv) * g + bt).astype(o_ref.dtype)


def gpt2_embeddings(input_ids, word_emb, pos_emb, gamma, beta, *,
                    position_ids=None, eps=1e-5, out_dtype=jnp.float32,
                    tokens_per_tile=512):
    """Pallas implementation of GPT2Embeddings.forward (eval mode).

    out_dtype may be set to jnp.bfloat16 to halve output HBM writeback when
    the consumer takes bf16; LayerNorm math is always f32.
    """
    B, S = input_ids.shape
    V, D = word_emb.shape
    P = pos_emb.shape[0]

    # Seq-tile size: multiple of 8 (sublane dense), capped by the target.
    tb = min(int(tokens_per_tile), -(-S // 8) * 8)
    tb = max(8, (tb // 8) * 8)
    s_pad = -(-S // tb) * tb
    ns = s_pad // tb

    ids = input_ids.astype(jnp.int32)
    if s_pad != S:
        ids = jnp.pad(ids, ((0, 0), (0, s_pad - S)))   # pad tokens use word row 0
    ids_flat = ids.reshape(B * s_pad)

    if position_ids is None:
        # Default registered buffer: arange(S) per batch.  Seq tile j needs the
        # contiguous rows [j*tb, (j+1)*tb) of the table -> plain pipelined DMA.
        pos_rows = pos_emb
        if P < s_pad:
            pos_rows = jnp.pad(pos_emb, ((0, s_pad - P), (0, 0)))
        pos_blocks = pos_rows[:s_pad]                               # (s_pad, D)
        pos_index = lambda b, j, ids: (j, 0)
    else:
        # Rare path: arbitrary position_ids.  Gather once with XLA and stream
        # the per-(b, j) blocks through the same pipelined input.
        pid = position_ids.astype(jnp.int32)
        if pid.shape[0] == 1 and B > 1:
            pid = jnp.broadcast_to(pid, (B, S))
        if s_pad != S:
            pid = jnp.pad(pid, ((0, 0), (0, s_pad - S)))
        pos_blocks = jnp.take(pos_emb, pid.reshape(B * s_pad), axis=0)  # (B*s_pad, D)
        pos_index = lambda b, j, ids: (b * ns + j, 0)

    gamma2d = gamma.reshape(1, D).astype(jnp.float32)
    beta2d = beta.reshape(1, D).astype(jnp.float32)

    # VMEM budget: word double buffer + pipelined pos/output double buffers +
    # f32 LayerNorm temporaries.  Cap at 64 MiB (v7x physical per-TC VMEM).
    out_isz = jnp.dtype(out_dtype).itemsize
    bytes_est = tb * D * (2 * word_emb.dtype.itemsize
                          + 2 * pos_blocks.dtype.itemsize
                          + 2 * out_isz
                          + 4 * 4)
    vmem_limit = int(min(max(2 * bytes_est, 32 * 2**20), 64 * 2**20))

    kernel = functools.partial(_embed_ln_kernel, eps=float(eps), tb=tb,
                               s_pad=s_pad)

    out = pl.pallas_call(
        kernel,
        out_shape=jax.ShapeDtypeStruct((B, s_pad, D), out_dtype),
        grid_spec=pltpu.PrefetchScalarGridSpec(
            num_scalar_prefetch=1,                # flat token ids -> SMEM
            grid=(B, ns),                         # (batch row, seq tile)
            in_specs=[
                pl.BlockSpec(memory_space=pl.ANY),                    # word table (HBM)
                pl.BlockSpec((tb, D), pos_index),                     # pos block (pipelined)
                pl.BlockSpec((1, D), lambda b, j, ids: (0, 0)),       # gamma (resident)
                pl.BlockSpec((1, D), lambda b, j, ids: (0, 0)),       # beta  (resident)
            ],
            out_specs=pl.BlockSpec((1, tb, D), lambda b, j, ids: (b, j, 0)),
            scratch_shapes=[
                pltpu.VMEM((2, tb, D), word_emb.dtype),   # gathered word rows (2 slots)
                pltpu.SemaphoreType.DMA((2,)),            # one DMA sem per slot
            ]),
        compiler_params=pltpu.CompilerParams(
            # batch axis carries no cross-step state -> "parallel" (multi-TC
            # capable); seq-tile axis owns the double-buffer hand-off.
            dimension_semantics=("parallel", "arbitrary"),
            vmem_limit_bytes=vmem_limit),
    )(ids_flat, word_emb, pos_blocks, gamma2d, beta2d)

    if s_pad != S:
        out = out[:, :S, :]
    return out


def _reference(input_ids, position_ids, word_emb, pos_emb, gamma, beta, eps):
    x = (jnp.take(word_emb, input_ids, axis=0)
         + jnp.take(pos_emb, position_ids, axis=0))
    mean = jnp.mean(x, axis=-1, keepdims=True)
    var = jnp.mean(jnp.square(x - mean), axis=-1, keepdims=True)
    return (x - mean) * jax.lax.rsqrt(var + eps) * gamma + beta


def _check(batch, seq, vocab_size, n_embd, max_pos, key, *, tokens_per_tile):
    k_w, k_p, k_ids = jax.random.split(key, 3)
    word_emb = jax.random.normal(k_w, (vocab_size, n_embd), dtype=jnp.float32)
    word_emb = word_emb.at[0].set(0.0)                     # padding_idx row
    pos_emb = jax.random.normal(k_p, (max_pos, n_embd), dtype=jnp.float32)
    gamma = jnp.ones((n_embd,), jnp.float32)
    beta = jnp.zeros((n_embd,), jnp.float32)
    input_ids = jax.random.randint(k_ids, (batch, seq), 0, vocab_size,
                                   dtype=jnp.int32)

    out = gpt2_embeddings(input_ids, word_emb, pos_emb, gamma, beta,
                          eps=1e-5, tokens_per_tile=tokens_per_tile)
    out = jax.block_until_ready(out)

    position_ids = jnp.broadcast_to(jnp.arange(seq, dtype=jnp.int32),
                                    (batch, seq))
    ref = _reference(input_ids, position_ids, word_emb, pos_emb, gamma, beta,
                     1e-5)
    np.testing.assert_allclose(np.asarray(out), np.asarray(ref),
                               rtol=1e-5, atol=1e-5)
    assert out.shape == (batch, seq, n_embd) and out.dtype == jnp.float32


if __name__ == "__main__":
    key = jax.random.PRNGKey(0)
    k1, k2 = jax.random.split(key)

    # Small config matching the module defaults (single seq tile per row).
    _check(batch=2, seq=8, vocab_size=64, n_embd=128, max_pos=16, key=k1,
           tokens_per_tile=512)

    # Multi-tile + padded-tail config to exercise the prime/prefetch
    # double-buffer hand-off and the bulk wait (seq=12 -> 2 tiles of 8).
    _check(batch=2, seq=12, vocab_size=64, n_embd=128, max_pos=16, key=k2,
           tokens_per_tile=8)

    print("KERNEL_OK")
</pallas_src>

<mosaic_0001>
module attributes {stable_mosaic.version = 11 : i64} {
  func.func @_embed_ln_kernel(%arg0: i32, %arg1: i32, %arg2: memref<16xi32, #tpu.memory_space<smem>>, %arg3: memref<64x128xf32, #tpu.memory_space<any>>, %arg4: memref<8x128xf32, #tpu.memory_space<vmem>>, %arg5: memref<1x128xf32, #tpu.memory_space<vmem>>, %arg6: memref<1x128xf32, #tpu.memory_space<vmem>>, %arg7: memref<1x8x128xf32, #tpu.memory_space<vmem>>, %arg8: memref<2x8x128xf32, #tpu.memory_space<vmem>>, %arg9: memref<2x!tpu.dma_semaphore, #tpu.memory_space<semaphore_mem>>) attributes {dimension_semantics = [#tpu.dimension_semantics<parallel>, #tpu.dimension_semantics<arbitrary>], iteration_bounds = array<i64: 2, 1>, scalar_prefetch = 1 : i64, scratch_operands = 2 : i64, tpu.core_type = #tpu.core_type<tc>, window_params = [{}, {transform_indices = @transform_1, window_bounds = array<i64: 8, 128>}, {pipeline_mode = #tpu.pipeline_mode<synchronous>, transform_indices = @transform_2, window_bounds = array<i64: 1, 128>}, {pipeline_mode = #tpu.pipeline_mode<synchronous>, transform_indices = @transform_3, window_bounds = array<i64: 1, 128>}, {transform_indices = @transform_4, window_bounds = array<i64: 1, 8, 128>}]} {
    %c0_i32 = arith.constant 0 : i32
    %0 = arith.cmpi eq, %arg1, %c0_i32 : i32
    %1 = arith.extui %0 : i1 to i32
    %c0_i32_0 = arith.constant 0 : i32
    %2 = arith.cmpi ne, %1, %c0_i32_0 : i32
    scf.if %2 {
      %c8_i32 = arith.constant 8 : i32
      %56 = arith.muli %arg0, %c8_i32 : i32
      %c0_i32_27 = arith.constant 0 : i32
      %57 = arith.addi %56, %c0_i32_27 : i32
      %58 = tpu.assume_multiple %57, 8 : i32
      %c0_i32_28 = arith.constant 0 : i32
      %c1_i32_29 = arith.constant 1 : i32
      %59 = arith.muli %c0_i32_28, %c1_i32_29 : i32
      %c0_i32_30 = arith.constant 0 : i32
      %60 = arith.addi %c0_i32_30, %59 : i32
      %c8_i32_31 = arith.constant 8 : i32
      %61 = arith.muli %60, %c8_i32_31 : i32
      %c0_i32_32 = arith.constant 0 : i32
      %62 = arith.addi %61, %c0_i32_32 : i32
      %63 = arith.addi %58, %62 : i32
      %64 = arith.index_cast %63 : i32 to index
      %65 = memref.load %arg2[%64] : memref<16xi32, #tpu.memory_space<smem>>
      %c0_i32_33 = arith.constant 0 : i32
      %c0_i32_34 = arith.constant 0 : i32
      %c0_i32_35 = arith.constant 0 : i32
      %66 = tpu.memref_slice %arg3[%65, %c0_i32_35] : memref<64x128xf32, #tpu.memory_space<any>> -> memref<1x128xf32, #tpu.memory_space<any>>
      %c0_i32_36 = arith.constant 0 : i32
      %67 = tpu.memref_slice %arg8[%c0_i32_33, %62, %c0_i32_36] : memref<2x8x128xf32, #tpu.memory_space<vmem>> -> memref<1x1x128xf32, #tpu.memory_space<vmem>>
      %68 = tpu.memref_squeeze %67 : memref<1x1x128xf32, #tpu.memory_space<vmem>> -> memref<1x128xf32, #tpu.memory_space<vmem>>
      %69 = tpu.memref_slice %arg9[%c0_i32_34] : memref<2x!tpu.dma_semaphore, #tpu.memory_space<semaphore_mem>> -> memref<1x!tpu.dma_semaphore, #tpu.memory_space<semaphore_mem>>
      %70 = tpu.memref_squeeze %69 : memref<1x!tpu.dma_semaphore, #tpu.memory_space<semaphore_mem>> -> memref<!tpu.dma_semaphore, #tpu.memory_space<semaphore_mem>>
      tpu.enqueue_dma source(%66 : memref<1x128xf32, #tpu.memory_space<any>>) target(%68 : memref<1x128xf32, #tpu.memory_space<vmem>>) target_semaphore(%70 : memref<!tpu.dma_semaphore, #tpu.memory_space<semaphore_mem>>)
      %c1_i32_37 = arith.constant 1 : i32
      %71 = arith.addi %61, %c1_i32_37 : i32
      %72 = arith.addi %58, %71 : i32
      %73 = arith.index_cast %72 : i32 to index
      %74 = memref.load %arg2[%73] : memref<16xi32, #tpu.memory_space<smem>>
      %c0_i32_38 = arith.constant 0 : i32
      %c0_i32_39 = arith.constant 0 : i32
      %c0_i32_40 = arith.constant 0 : i32
      %75 = tpu.memref_slice %arg3[%74, %c0_i32_40] : memref<64x128xf32, #tpu.memory_space<any>> -> memref<1x128xf32, #tpu.memory_space<any>>
      %c0_i32_41 = arith.constant 0 : i32
      %76 = tpu.memref_slice %arg8[%c0_i32_38, %71, %c0_i32_41] : memref<2x8x128xf32, #tpu.memory_space<vmem>> -> memref<1x1x128xf32, #tpu.memory_space<vmem>>
      %77 = tpu.memref_squeeze %76 : memref<1x1x128xf32, #tpu.memory_space<vmem>> -> memref<1x128xf32, #tpu.memory_space<vmem>>
      %78 = tpu.memref_slice %arg9[%c0_i32_39] : memref<2x!tpu.dma_semaphore, #tpu.memory_space<semaphore_mem>> -> memref<1x!tpu.dma_semaphore, #tpu.memory_space<semaphore_mem>>
      %79 = tpu.memref_squeeze %78 : memref<1x!tpu.dma_semaphore, #tpu.memory_space<semaphore_mem>> -> memref<!tpu.dma_semaphore, #tpu.memory_space<semaphore_mem>>
      tpu.enqueue_dma source(%75 : memref<1x128xf32, #tpu.memory_space<any>>) target(%77 : memref<1x128xf32, #tpu.memory_space<vmem>>) target_semaphore(%79 : memref<!tpu.dma_semaphore, #tpu.memory_space<semaphore_mem>>)
      %c2_i32_42 = arith.constant 2 : i32
      %80 = arith.addi %61, %c2_i32_42 : i32
      %81 = arith.addi %58, %80 : i32
      %82 = arith.index_cast %81 : i32 to index
      %83 = memref.load %arg2[%82] : memref<16xi32, #tpu.memory_space<smem>>
      %c0_i32_43 = arith.constant 0 : i32
      %c0_i32_44 = arith.constant 0 : i32
      %c0_i32_45 = arith.constant 0 : i32
      %84 = tpu.memref_slice %arg3[%83, %c0_i32_45] : memref<64x128xf32, #tpu.memory_space<any>> -> memref<1x128xf32, #tpu.memory_space<any>>
      %c0_i32_46 = arith.constant 0 : i32
      %85 = tpu.memref_slice %arg8[%c0_i32_43, %80, %c0_i32_46] : memref<2x8x128xf32, #tpu.memory_space<vmem>> -> memref<1x1x128xf32, #tpu.memory_space<vmem>>
      %86 = tpu.memref_squeeze %85 : memref<1x1x128xf32, #tpu.memory_space<vmem>> -> memref<1x128xf32, #tpu.memory_space<vmem>>
      %87 = tpu.memref_slice %arg9[%c0_i32_44] : memref<2x!tpu.dma_semaphore, #tpu.memory_space<semaphore_mem>> -> memref<1x!tpu.dma_semaphore, #tpu.memory_space<semaphore_mem>>
      %88 = tpu.memref_squeeze %87 : memref<1x!tpu.dma_semaphore, #tpu.memory_space<semaphore_mem>> -> memref<!tpu.dma_semaphore, #tpu.memory_space<semaphore_mem>>
      tpu.enqueue_dma source(%84 : memref<1x128xf32, #tpu.memory_space<any>>) target(%86 : memref<1x128xf32, #tpu.memory_space<vmem>>) target_semaphore(%88 : memref<!tpu.dma_semaphore, #tpu.memory_space<semaphore_mem>>)
      %c3_i32 = arith.constant 3 : i32
      %89 = arith.addi %61, %c3_i32 : i32
      %90 = arith.addi %58, %89 : i32
      %91 = arith.index_cast %90 : i32 to index
      %92 = memref.load %arg2[%91] : memref<16xi32, #tpu.memory_space<smem>>
      %c0_i32_47 = arith.constant 0 : i32
      %c0_i32_48 = arith.constant 0 : i32
      %c0_i32_49 = arith.constant 0 : i32
      %93 = tpu.memref_slice %arg3[%92, %c0_i32_49] : memref<64x128xf32, #tpu.memory_space<any>> -> memref<1x128xf32, #tpu.memory_space<any>>
      %c0_i32_50 = arith.constant 0 : i32
      %94 = tpu.memref_slice %arg8[%c0_i32_47, %89, %c0_i32_50] : memref<2x8x128xf32, #tpu.memory_space<vmem>> -> memref<1x1x128xf32, #tpu.memory_space<vmem>>
      %95 = tpu.memref_squeeze %94 : memref<1x1x128xf32, #tpu.memory_space<vmem>> -> memref<1x128xf32, #tpu.memory_space<vmem>>
      %96 = tpu.memref_slice %arg9[%c0_i32_48] : memref<2x!tpu.dma_semaphore, #tpu.memory_space<semaphore_mem>> -> memref<1x!tpu.dma_semaphore, #tpu.memory_space<semaphore_mem>>
      %97 = tpu.memref_squeeze %96 : memref<1x!tpu.dma_semaphore, #tpu.memory_space<semaphore_mem>> -> memref<!tpu.dma_semaphore, #tpu.memory_space<semaphore_mem>>
      tpu.enqueue_dma source(%93 : memref<1x128xf32, #tpu.memory_space<any>>) target(%95 : memref<1x128xf32, #tpu.memory_space<vmem>>) target_semaphore(%97 : memref<!tpu.dma_semaphore, #tpu.memory_space<semaphore_mem>>)
      %c4_i32 = arith.constant 4 : i32
      %98 = arith.addi %61, %c4_i32 : i32
      %99 = arith.addi %58, %98 : i32
      %100 = arith.index_cast %99 : i32 to index
      %101 = memref.load %arg2[%100] : memref<16xi32, #tpu.memory_space<smem>>
      %c0_i32_51 = arith.constant 0 : i32
      %c0_i32_52 = arith.constant 0 : i32
      %c0_i32_53 = arith.constant 0 : i32
      %102 = tpu.memref_slice %arg3[%101, %c0_i32_53] : memref<64x128xf32, #tpu.memory_space<any>> -> memref<1x128xf32, #tpu.memory_space<any>>
      %c0_i32_54 = arith.constant 0 : i32
      %103 = tpu.memref_slice %arg8[%c0_i32_51, %98, %c0_i32_54] : memref<2x8x128xf32, #tpu.memory_space<vmem>> -> memref<1x1x128xf32, #tpu.memory_space<vmem>>
      %104 = tpu.memref_squeeze %103 : memref<1x1x128xf32, #tpu.memory_space<vmem>> -> memref<1x128xf32, #tpu.memory_space<vmem>>
      %105 = tpu.memref_slice %arg9[%c0_i32_52] : memref<2x!tpu.dma_semaphore, #tpu.memory_space<semaphore_mem>> -> memref<1x!tpu.dma_semaphore, #tpu.memory_space<semaphore_mem>>
      %106 = tpu.memref_squeeze %105 : memref<1x!tpu.dma_semaphore, #tpu.memory_space<semaphore_mem>> -> memref<!tpu.dma_semaphore, #tpu.memory_space<semaphore_mem>>
      tpu.enqueue_dma source(%102 : memref<1x128xf32, #tpu.memory_space<any>>) target(%104 : memref<1x128xf32, #tpu.memory_space<vmem>>) target_semaphore(%106 : memref<!tpu.dma_semaphore, #tpu.memory_space<semaphore_mem>>)
      %c5_i32 = arith.constant 5 : i32
      %107 = arith.addi %61, %c5_i32 : i32
      %108 = arith.addi %58, %107 : i32
      %109 = arith.index_cast %108 : i32 to index
      %110 = memref.load %arg2[%109] : memref<16xi32, #tpu.memory_space<smem>>
      %c0_i32_55 = arith.constant 0 : i32
      %c0_i32_56 = arith.constant 0 : i32
      %c0_i32_57 = arith.constant 0 : i32
      %111 = tpu.memref_slice %arg3[%110, %c0_i32_57] : memref<64x128xf32, #tpu.memory_space<any>> -> memref<1x128xf32, #tpu.memory_space<any>>
      %c0_i32_58 = arith.constant 0 : i32
      %112 = tpu.memref_slice %arg8[%c0_i32_55, %107, %c0_i32_58] : memref<2x8x128xf32, #tpu.memory_space<vmem>> -> memref<1x1x128xf32, #tpu.memory_space<vmem>>
      %113 = tpu.memref_squeeze %112 : memref<1x1x128xf32, #tpu.memory_space<vmem>> -> memref<1x128xf32, #tpu.memory_space<vmem>>
      %114 = tpu.memref_slice %arg9[%c0_i32_56] : memref<2x!tpu.dma_semaphore, #tpu.memory_space<semaphore_mem>> -> memref<1x!tpu.dma_semaphore, #tpu.memory_space<semaphore_mem>>
      %115 = tpu.memref_squeeze %114 : memref<1x!tpu.dma_semaphore, #tpu.memory_space<semaphore_mem>> -> memref<!tpu.dma_semaphore, #tpu.memory_space<semaphore_mem>>
      tpu.enqueue_dma source(%111 : memref<1x128xf32, #tpu.memory_space<any>>) target(%113 : memref<1x128xf32, #tpu.memory_space<vmem>>) target_semaphore(%115 : memref<!tpu.dma_semaphore, #tpu.memory_space<semaphore_mem>>)
      %c6_i32 = arith.constant 6 : i32
      %116 = arith.addi %61, %c6_i32 : i32
      %117 = arith.addi %58, %116 : i32
      %118 = arith.index_cast %117 : i32 to index
      %119 = memref.load %arg2[%118] : memref<16xi32, #tpu.memory_space<smem>>
      %c0_i32_59 = arith.constant 0 : i32
      %c0_i32_60 = arith.constant 0 : i32
      %c0_i32_61 = arith.constant 0 : i32
      %120 = tpu.memref_slice %arg3[%119, %c0_i32_61] : memref<64x128xf32, #tpu.memory_space<any>> -> memref<1x128xf32, #tpu.memory_space<any>>
      %c0_i32_62 = arith.constant 0 : i32
      %121 = tpu.memref_slice %arg8[%c0_i32_59, %116, %c0_i32_62] : memref<2x8x128xf32, #tpu.memory_space<vmem>> -> memref<1x1x128xf32, #tpu.memory_space<vmem>>
      %122 = tpu.memref_squeeze %121 : memref<1x1x128xf32, #tpu.memory_space<vmem>> -> memref<1x128xf32, #tpu.memory_space<vmem>>
      %123 = tpu.memref_slice %arg9[%c0_i32_60] : memref<2x!tpu.dma_semaphore, #tpu.memory_space<semaphore_mem>> -> memref<1x!tpu.dma_semaphore, #tpu.memory_space<semaphore_mem>>
      %124 = tpu.memref_squeeze %123 : memref<1x!tpu.dma_semaphore, #tpu.memory_space<semaphore_mem>> -> memref<!tpu.dma_semaphore, #tpu.memory_space<semaphore_mem>>
      tpu.enqueue_dma source(%120 : memref<1x128xf32, #tpu.memory_space<any>>) target(%122 : memref<1x128xf32, #tpu.memory_space<vmem>>) target_semaphore(%124 : memref<!tpu.dma_semaphore, #tpu.memory_space<semaphore_mem>>)
      %c7_i32 = arith.constant 7 : i32
      %125 = arith.addi %61, %c7_i32 : i32
      %126 = arith.addi %58, %125 : i32
      %127 = arith.index_cast %126 : i32 to index
      %128 = memref.load %arg2[%127] : memref<16xi32, #tpu.memory_space<smem>>
      %c0_i32_63 = arith.constant 0 : i32
      %c0_i32_64 = arith.constant 0 : i32
      %c0_i32_65 = arith.constant 0 : i32
      %129 = tpu.memref_slice %arg3[%128, %c0_i32_65] : memref<64x128xf32, #tpu.memory_space<any>> -> memref<1x128xf32, #tpu.memory_space<any>>
      %c0_i32_66 = arith.constant 0 : i32
      %130 = tpu.memref_slice %arg8[%c0_i32_63, %125, %c0_i32_66] : memref<2x8x128xf32, #tpu.memory_space<vmem>> -> memref<1x1x128xf32, #tpu.memory_space<vmem>>
      %131 = tpu.memref_squeeze %130 : memref<1x1x128xf32, #tpu.memory_space<vmem>> -> memref<1x128xf32, #tpu.memory_space<vmem>>
      %132 = tpu.memref_slice %arg9[%c0_i32_64] : memref<2x!tpu.dma_semaphore, #tpu.memory_space<semaphore_mem>> -> memref<1x!tpu.dma_semaphore, #tpu.memory_space<semaphore_mem>>
      %133 = tpu.memref_squeeze %132 : memref<1x!tpu.dma_semaphore, #tpu.memory_space<semaphore_mem>> -> memref<!tpu.dma_semaphore, #tpu.memory_space<semaphore_mem>>
      tpu.enqueue_dma source(%129 : memref<1x128xf32, #tpu.memory_space<any>>) target(%131 : memref<1x128xf32, #tpu.memory_space<vmem>>) target_semaphore(%133 : memref<!tpu.dma_semaphore, #tpu.memory_space<semaphore_mem>>)
      %c1_i32_67 = arith.constant 1 : i32
    } else {
    }
    %c1_i32 = arith.constant 1 : i32
    %3 = arith.addi %arg1, %c1_i32 : i32
    %c1_i32_1 = arith.constant 1 : i32
    %4 = arith.cmpi slt, %3, %c1_i32_1 : i32
    %5 = arith.extui %4 : i1 to i32
    %c0_i32_2 = arith.constant 0 : i32
    %6 = arith.cmpi ne, %5, %c0_i32_2 : i32
    scf.if %6 {
      %c1_i32_27 = arith.constant 1 : i32
      %56 = arith.addi %arg1, %c1_i32_27 : i32
      %c1_i32_28 = arith.constant 1 : i32
      %57 = arith.addi %arg1, %c1_i32_28 : i32
      %c2_i32_29 = arith.constant 2 : i32
      %c0_i32_30 = arith.constant 0 : i32
      %58 = arith.cmpi eq, %c2_i32_29, %c0_i32_30 : i32
      %c1_i32_31 = arith.constant 1 : i32
      %59 = arith.select %58, %c1_i32_31, %c2_i32_29 : i32
      %60 = arith.remsi %57, %59 : i32
      %c0_i32_32 = arith.constant 0 : i32
      %61 = arith.cmpi ne, %60, %c0_i32_32 : i32
      %c0_i32_33 = arith.constant 0 : i32
      %62 = arith.cmpi slt, %60, %c0_i32_33 : i32
      %c0_i32_34 = arith.constant 0 : i32
      %63 = arith.cmpi slt, %59, %c0_i32_34 : i32
      %64 = arith.xori %62, %63 : i1
      %65 = arith.andi %64, %61 : i1
      %66 = arith.addi %60, %59 : i32
      %67 = arith.select %65, %66, %60 : i32
      %c8_i32 = arith.constant 8 : i32
      %68 = arith.muli %arg0, %c8_i32 : i32
      %c8_i32_35 = arith.constant 8 : i32
      %69 = arith.muli %56, %c8_i32_35 : i32
      %70 = arith.addi %68, %69 : i32
      %71 = tpu.assume_multiple %70, 8 : i32
      %c0_i32_36 = arith.constant 0 : i32
      %c1_i32_37 = arith.constant 1 : i32
      %72 = arith.muli %c0_i32_36, %c1_i32_37 : i32
      %c0_i32_38 = arith.constant 0 : i32
      %73 = arith.addi %c0_i32_38, %72 : i32
      %c8_i32_39 = arith.constant 8 : i32
      %74 = arith.muli %73, %c8_i32_39 : i32
      %c0_i32_40 = arith.constant 0 : i32
      %75 = arith.addi %74, %c0_i32_40 : i32
      %76 = arith.addi %71, %75 : i32
      %77 = arith.index_cast %76 : i32 to index
      %78 = memref.load %arg2[%77] : memref<16xi32, #tpu.memory_space<smem>>
      %c0_i32_41 = arith.constant 0 : i32
      %79 = tpu.memref_slice %arg3[%78, %c0_i32_41] : memref<64x128xf32, #tpu.memory_space<any>> -> memref<1x128xf32, #tpu.memory_space<any>>
      %c0_i32_42 = arith.constant 0 : i32
      %80 = tpu.memref_slice %arg8[%67, %75, %c0_i32_42] : memref<2x8x128xf32, #tpu.memory_space<vmem>> -> memref<1x1x128xf32, #tpu.memory_space<vmem>>
      %81 = tpu.memref_squeeze %80 : memref<1x1x128xf32, #tpu.memory_space<vmem>> -> memref<1x128xf32, #tpu.memory_space<vmem>>
      %82 = tpu.memref_slice %arg9[%67] : memref<2x!tpu.dma_semaphore, #tpu.memory_space<semaphore_mem>> -> memref<1x!tpu.dma_semaphore, #tpu.memory_space<semaphore_mem>>
      %83 = tpu.memref_squeeze %82 : memref<1x!tpu.dma_semaphore, #tpu.memory_space<semaphore_mem>> -> memref<!tpu.dma_semaphore, #tpu.memory_space<semaphore_mem>>
      tpu.enqueue_dma source(%79 : memref<1x128xf32, #tpu.memory_space<any>>) target(%81 : memref<1x128xf32, #tpu.memory_space<vmem>>) target_semaphore(%83 : memref<!tpu.dma_semaphore, #tpu.memory_space<semaphore_mem>>)
      %c1_i32_43 = arith.constant 1 : i32
      %84 = arith.addi %74, %c1_i32_43 : i32
      %85 = arith.addi %71, %84 : i32
      %86 = arith.index_cast %85 : i32 to index
      %87 = memref.load %arg2[%86] : memref<16xi32, #tpu.memory_space<smem>>
      %c0_i32_44 = arith.constant 0 : i32
      %88 = tpu.memref_slice %arg3[%87, %c0_i32_44] : memref<64x128xf32, #tpu.memory_space<any>> -> memref<1x128xf32, #tpu.memory_space<any>>
      %c0_i32_45 = arith.constant 0 : i32
      %89 = tpu.memref_slice %arg8[%67, %84, %c0_i32_45] : memref<2x8x128xf32, #tpu.memory_space<vmem>> -> memref<1x1x128xf32, #tpu.memory_space<vmem>>
      %90 = tpu.memref_squeeze %89 : memref<1x1x128xf32, #tpu.memory_space<vmem>> -> memref<1x128xf32, #tpu.memory_space<vmem>>
      %91 = tpu.memref_slice %arg9[%67] : memref<2x!tpu.dma_semaphore, #tpu.memory_space<semaphore_mem>> -> memref<1x!tpu.dma_semaphore, #tpu.memory_space<semaphore_mem>>
      %92 = tpu.memref_squeeze %91 : memref<1x!tpu.dma_semaphore, #tpu.memory_space<semaphore_mem>> -> memref<!tpu.dma_semaphore, #tpu.memory_space<semaphore_mem>>
      tpu.enqueue_dma source(%88 : memref<1x128xf32, #tpu.memory_space<any>>) target(%90 : memref<1x128xf32, #tpu.memory_space<vmem>>) target_semaphore(%92 : memref<!tpu.dma_semaphore, #tpu.memory_space<semaphore_mem>>)
      %c2_i32_46 = arith.constant 2 : i32
      %93 = arith.addi %74, %c2_i32_46 : i32
      %94 = arith.addi %71, %93 : i32
      %95 = arith.index_cast %94 : i32 to index
      %96 = memref.load %arg2[%95] : memref<16xi32, #tpu.memory_space<smem>>
      %c0_i32_47 = arith.constant 0 : i32
      %97 = tpu.memref_slice %arg3[%96, %c0_i32_47] : memref<64x128xf32, #tpu.memory_space<any>> -> memref<1x128xf32, #tpu.memory_space<any>>
      %c0_i32_48 = arith.constant 0 : i32
      %98 = tpu.memref_slice %arg8[%67, %93, %c0_i32_48] : memref<2x8x128xf32, #tpu.memory_space<vmem>> -> memref<1x1x128xf32, #tpu.memory_space<vmem>>
      %99 = tpu.memref_squeeze %98 : memref<1x1x128xf32, #tpu.memory_space<vmem>> -> memref<1x128xf32, #tpu.memory_space<vmem>>
      %100 = tpu.memref_slice %arg9[%67] : memref<2x!tpu.dma_semaphore, #tpu.memory_space<semaphore_mem>> -> memref<1x!tpu.dma_semaphore, #tpu.memory_space<semaphore_mem>>
      %101 = tpu.memref_squeeze %100 : memref<1x!tpu.dma_semaphore, #tpu.memory_space<semaphore_mem>> -> memref<!tpu.dma_semaphore, #tpu.memory_space<semaphore_mem>>
      tpu.enqueue_dma source(%97 : memref<1x128xf32, #tpu.memory_space<any>>) target(%99 : memref<1x128xf32, #tpu.memory_space<vmem>>) target_semaphore(%101 : memref<!tpu.dma_semaphore, #tpu.memory_space<semaphore_mem>>)
      %c3_i32 = arith.constant 3 : i32
      %102 = arith.addi %74, %c3_i32 : i32
      %103 = arith.addi %71, %102 : i32
      %104 = arith.index_cast %103 : i32 to index
      %105 = memref.load %arg2[%104] : memref<16xi32, #tpu.memory_space<smem>>
      %c0_i32_49 = arith.constant 0 : i32
      %106 = tpu.memref_slice %arg3[%105, %c0_i32_49] : memref<64x128xf32, #tpu.memory_space<any>> -> memref<1x128xf32, #tpu.memory_space<any>>
      %c0_i32_50 = arith.constant 0 : i32
      %107 = tpu.memref_slice %arg8[%67, %102, %c0_i32_50] : memref<2x8x128xf32, #tpu.memory_space<vmem>> -> memref<1x1x128xf32, #tpu.memory_space<vmem>>
      %108 = tpu.memref_squeeze %107 : memref<1x1x128xf32, #tpu.memory_space<vmem>> -> memref<1x128xf32, #tpu.memory_space<vmem>>
      %109 = tpu.memref_slice %arg9[%67] : memref<2x!tpu.dma_semaphore, #tpu.memory_space<semaphore_mem>> -> memref<1x!tpu.dma_semaphore, #tpu.memory_space<semaphore_mem>>
      %110 = tpu.memref_squeeze %109 : memref<1x!tpu.dma_semaphore, #tpu.memory_space<semaphore_mem>> -> memref<!tpu.dma_semaphore, #tpu.memory_space<semaphore_mem>>
      tpu.enqueue_dma source(%106 : memref<1x128xf32, #tpu.memory_space<any>>) target(%108 : memref<1x128xf32, #tpu.memory_space<vmem>>) target_semaphore(%110 : memref<!tpu.dma_semaphore, #tpu.memory_space<semaphore_mem>>)
      %c4_i32 = arith.constant 4 : i32
      %111 = arith.addi %74, %c4_i32 : i32
      %112 = arith.addi %71, %111 : i32
      %113 = arith.index_cast %112 : i32 to index
      %114 = memref.load %arg2[%113] : memref<16xi32, #tpu.memory_space<smem>>
      %c0_i32_51 = arith.constant 0 : i32
      %115 = tpu.memref_slice %arg3[%114, %c0_i32_51] : memref<64x128xf32, #tpu.memory_space<any>> -> memref<1x128xf32, #tpu.memory_space<any>>
      %c0_i32_52 = arith.constant 0 : i32
      %116 = tpu.memref_slice %arg8[%67, %111, %c0_i32_52] : memref<2x8x128xf32, #tpu.memory_space<vmem>> -> memref<1x1x128xf32, #tpu.memory_space<vmem>>
      %117 = tpu.memref_squeeze %116 : memref<1x1x128xf32, #tpu.memory_space<vmem>> -> memref<1x128xf32, #tpu.memory_space<vmem>>
      %118 = tpu.memref_slice %arg9[%67] : memref<2x!tpu.dma_semaphore, #tpu.memory_space<semaphore_mem>> -> memref<1x!tpu.dma_semaphore, #tpu.memory_space<semaphore_mem>>
      %119 = tpu.memref_squeeze %118 : memref<1x!tpu.dma_semaphore, #tpu.memory_space<semaphore_mem>> -> memref<!tpu.dma_semaphore, #tpu.memory_space<semaphore_mem>>
      tpu.enqueue_dma source(%115 : memref<1x128xf32, #tpu.memory_space<any>>) target(%117 : memref<1x128xf32, #tpu.memory_space<vmem>>) target_semaphore(%119 : memref<!tpu.dma_semaphore, #tpu.memory_space<semaphore_mem>>)
      %c5_i32 = arith.constant 5 : i32
      %120 = arith.addi %74, %c5_i32 : i32
      %121 = arith.addi %71, %120 : i32
      %122 = arith.index_cast %121 : i32 to index
      %123 = memref.load %arg2[%122] : memref<16xi32, #tpu.memory_space<smem>>
      %c0_i32_53 = arith.constant 0 : i32
      %124 = tpu.memref_slice %arg3[%123, %c0_i32_53] : memref<64x128xf32, #tpu.memory_space<any>> -> memref<1x128xf32, #tpu.memory_space<any>>
      %c0_i32_54 = arith.constant 0 : i32
      %125 = tpu.memref_slice %arg8[%67, %120, %c0_i32_54] : memref<2x8x128xf32, #tpu.memory_space<vmem>> -> memref<1x1x128xf32, #tpu.memory_space<vmem>>
      %126 = tpu.memref_squeeze %125 : memref<1x1x128xf32, #tpu.memory_space<vmem>> -> memref<1x128xf32, #tpu.memory_space<vmem>>
      %127 = tpu.memref_slice %arg9[%67] : memref<2x!tpu.dma_semaphore, #tpu.memory_space<semaphore_mem>> -> memref<1x!tpu.dma_semaphore, #tpu.memory_space<semaphore_mem>>
      %128 = tpu.memref_squeeze %127 : memref<1x!tpu.dma_semaphore, #tpu.memory_space<semaphore_mem>> -> memref<!tpu.dma_semaphore, #tpu.memory_space<semaphore_mem>>
      tpu.enqueue_dma source(%124 : memref<1x128xf32, #tpu.memory_space<any>>) target(%126 : memref<1x128xf32, #tpu.memory_space<vmem>>) target_semaphore(%128 : memref<!tpu.dma_semaphore, #tpu.memory_space<semaphore_mem>>)
      %c6_i32 = arith.constant 6 : i32
      %129 = arith.addi %74, %c6_i32 : i32
      %130 = arith.addi %71, %129 : i32
      %131 = arith.index_cast %130 : i32 to index
      %132 = memref.load %arg2[%131] : memref<16xi32, #tpu.memory_space<smem>>
      %c0_i32_55 = arith.constant 0 : i32
      %133 = tpu.memref_slice %arg3[%132, %c0_i32_55] : memref<64x128xf32, #tpu.memory_space<any>> -> memref<1x128xf32, #tpu.memory_space<any>>
      %c0_i32_56 = arith.constant 0 : i32
      %134 = tpu.memref_slice %arg8[%67, %129, %c0_i32_56] : memref<2x8x128xf32, #tpu.memory_space<vmem>> -> memref<1x1x128xf32, #tpu.memory_space<vmem>>
      %135 = tpu.memref_squeeze %134 : memref<1x1x128xf32, #tpu.memory_space<vmem>> -> memref<1x128xf32, #tpu.memory_space<vmem>>
      %136 = tpu.memref_slice %arg9[%67] : memref<2x!tpu.dma_semaphore, #tpu.memory_space<semaphore_mem>> -> memref<1x!tpu.dma_semaphore, #tpu.memory_space<semaphore_mem>>
      %137 = tpu.memref_squeeze %136 : memref<1x!tpu.dma_semaphore, #tpu.memory_space<semaphore_mem>> -> memref<!tpu.dma_semaphore, #tpu.memory_space<semaphore_mem>>
      tpu.enqueue_dma source(%133 : memref<1x128xf32, #tpu.memory_space<any>>) target(%135 : memref<1x128xf32, #tpu.memory_space<vmem>>) target_semaphore(%137 : memref<!tpu.dma_semaphore, #tpu.memory_space<semaphore_mem>>)
      %c7_i32 = arith.constant 7 : i32
      %138 = arith.addi %74, %c7_i32 : i32
      %139 = arith.addi %71, %138 : i32
      %140 = arith.index_cast %139 : i32 to index
      %141 = memref.load %arg2[%140] : memref<16xi32, #tpu.memory_space<smem>>
      %c0_i32_57 = arith.constant 0 : i32
      %142 = tpu.memref_slice %arg3[%141, %c0_i32_57] : memref<64x128xf32, #tpu.memory_space<any>> -> memref<1x128xf32, #tpu.memory_space<any>>
      %c0_i32_58 = arith.constant 0 : i32
      %143 = tpu.memref_slice %arg8[%67, %138, %c0_i32_58] : memref<2x8x128xf32, #tpu.memory_space<vmem>> -> memref<1x1x128xf32, #tpu.memory_space<vmem>>
      %144 = tpu.memref_squeeze %143 : memref<1x1x128xf32, #tpu.memory_space<vmem>> -> memref<1x128xf32, #tpu.memory_space<vmem>>
      %145 = tpu.memref_slice %arg9[%67] : memref<2x!tpu.dma_semaphore, #tpu.memory_space<semaphore_mem>> -> memref<1x!tpu.dma_semaphore, #tpu.memory_space<semaphore_mem>>
      %146 = tpu.memref_squeeze %145 : memref<1x!tpu.dma_semaphore, #tpu.memory_space<semaphore_mem>> -> memref<!tpu.dma_semaphore, #tpu.memory_space<semaphore_mem>>
      tpu.enqueue_dma source(%142 : memref<1x128xf32, #tpu.memory_space<any>>) target(%144 : memref<1x128xf32, #tpu.memory_space<vmem>>) target_semaphore(%146 : memref<!tpu.dma_semaphore, #tpu.memory_space<semaphore_mem>>)
      %c1_i32_59 = arith.constant 1 : i32
    } else {
    }
    %c2_i32 = arith.constant 2 : i32
    %c0_i32_3 = arith.constant 0 : i32
    %7 = arith.cmpi eq, %c2_i32, %c0_i32_3 : i32
    %c1_i32_4 = arith.constant 1 : i32
    %8 = arith.select %7, %c1_i32_4, %c2_i32 : i32
    %9 = arith.remsi %arg1, %8 : i32
    %c0_i32_5 = arith.constant 0 : i32
    %10 = arith.cmpi ne, %9, %c0_i32_5 : i32
    %c0_i32_6 = arith.constant 0 : i32
    %11 = arith.cmpi slt, %9, %c0_i32_6 : i32
    %c0_i32_7 = arith.constant 0 : i32
    %12 = arith.cmpi slt, %8, %c0_i32_7 : i32
    %13 = arith.xori %11, %12 : i1
    %14 = arith.andi %13, %10 : i1
    %15 = arith.addi %9, %8 : i32
    %16 = arith.select %14, %15, %9 : i32
    %c0_i32_8 = arith.constant 0 : i32
    %c0_i32_9 = arith.constant 0 : i32
    %17 = tpu.memref_slice %arg3[%c0_i32_8, %c0_i32_9] : memref<64x128xf32, #tpu.memory_space<any>> -> memref<8x128xf32, #tpu.memory_space<any>>
    %c0_i32_10 = arith.constant 0 : i32
    %c0_i32_11 = arith.constant 0 : i32
    %18 = tpu.memref_slice %arg8[%16, %c0_i32_10, %c0_i32_11] : memref<2x8x128xf32, #tpu.memory_space<vmem>> -> memref<1x8x128xf32, #tpu.memory_space<vmem>>
    %19 = tpu.memref_squeeze %18 : memref<1x8x128xf32, #tpu.memory_space<vmem>> -> memref<8x128xf32, #tpu.memory_space<vmem>>
    %20 = tpu.memref_slice %arg9[%16] : memref<2x!tpu.dma_semaphore, #tpu.memory_space<semaphore_mem>> -> memref<1x!tpu.dma_semaphore, #tpu.memory_space<semaphore_mem>>
    %21 = tpu.memref_squeeze %20 : memref<1x!tpu.dma_semaphore, #tpu.memory_space<semaphore_mem>> -> memref<!tpu.dma_semaphore, #tpu.memory_space<semaphore_mem>>
    tpu.wait_dma2 semaphore(%21 : memref<!tpu.dma_semaphore, #tpu.memory_space<semaphore_mem>>) src(%17 : memref<8x128xf32, #tpu.memory_space<any>>) dst(%19 : memref<8x128xf32, #tpu.memory_space<vmem>>)
    %22 = arith.index_cast %16 : i32 to index
    %c0 = arith.constant 0 : index
    %c0_12 = arith.constant 0 : index
    %23 = vector.load %arg8[%22, %c0, %c0_12] : memref<2x8x128xf32, #tpu.memory_space<vmem>>, vector<1x8x128xf32>
    %24 = vector.shape_cast %23 : vector<1x8x128xf32> to vector<8x128xf32>
    %c0_13 = arith.constant 0 : index
    %c0_14 = arith.constant 0 : index
    %25 = vector.load %arg4[%c0_13, %c0_14] : memref<8x128xf32, #tpu.memory_space<vmem>>, vector<8x128xf32>
    %26 = arith.addf %24, %25 : vector<8x128xf32>
    %cst = arith.constant dense<0.000000e+00> : vector<8xf32>
    %27 = vector.multi_reduction <add>, %26, %cst [1] : vector<8x128xf32> to vector<8xf32>
    %28 = vector.shape_cast %27 : vector<8xf32> to vector<8x1xf32>
    %cst_15 = arith.constant 1.280000e+02 : f32
    %29 = vector.broadcast %cst_15 : f32 to vector<8x1xf32>
    %30 = arith.divf %28, %29 : vector<8x1xf32>
    %31 = arith.mulf %26, %26 : vector<8x128xf32>
    %cst_16 = arith.constant dense<0.000000e+00> : vector<8xf32>
    %32 = vector.multi_reduction <add>, %31, %cst_16 [1] : vector<8x128xf32> to vector<8xf32>
    %33 = vector.shape_cast %32 : vector<8xf32> to vector<8x1xf32>
    %cst_17 = arith.constant 1.280000e+02 : f32
    %34 = vector.broadcast %cst_17 : f32 to vector<8x1xf32>
    %35 = arith.divf %33, %34 : vector<8x1xf32>
    %36 = arith.mulf %30, %30 : vector<8x1xf32>
    %37 = arith.subf %35, %36 : vector<8x1xf32>
    %cst_18 = arith.constant 0.000000e+00 : f32
    %38 = vector.broadcast %cst_18 : f32 to vector<8x1xf32>
    %39 = arith.maximumf %37, %38 : vector<8x1xf32>
    %cst_19 = arith.constant 9.99999974E-6 : f32
    %40 = vector.broadcast %cst_19 : f32 to vector<8x1xf32>
    %41 = arith.addf %39, %40 : vector<8x1xf32>
    %42 = math.rsqrt %41 : vector<8x1xf32>
    %c0_20 = arith.constant 0 : index
    %c0_21 = arith.constant 0 : index
    %43 = vector.load %arg5[%c0_20, %c0_21] : memref<1x128xf32, #tpu.memory_space<vmem>>, vector<1x128xf32>
    %c0_22 = arith.constant 0 : index
    %c0_23 = arith.constant 0 : index
    %44 = vector.load %arg6[%c0_22, %c0_23] : memref<1x128xf32, #tpu.memory_space<vmem>>, vector<1x128xf32>
    %45 = vector.broadcast %30 : vector<8x1xf32> to vector<8x128xf32>
    %46 = arith.subf %26, %45 : vector<8x128xf32>
    %47 = vector.broadcast %42 : vector<8x1xf32> to vector<8x128xf32>
    %48 = arith.mulf %46, %47 : vector<8x128xf32>
    %49 = vector.broadcast %43 : vector<1x128xf32> to vector<8x128xf32>
    %50 = arith.mulf %48, %49 : vector<8x128xf32>
    %51 = vector.broadcast %44 : vector<1x128xf32> to vector<8x128xf32>
    %52 = arith.addf %50, %51 : vector<8x128xf32>
    %c0_24 = arith.constant 0 : index
    %c0_25 = arith.constant 0 : index
    %c0_26 = arith.constant 0 : index
    %53 = vector.load %arg7[%c0_24, %c0_25, %c0_26] : memref<1x8x128xf32, #tpu.memory_space<vmem>>, vector<1x8x128xf32>
    %54 = vector.shape_cast %53 : vector<1x8x128xf32> to vector<8x128xf32>
    %55 = vector.shape_cast %52 : vector<8x128xf32> to vector<1x8x128xf32>
    tpu.vector_store %arg7[%c0_24, %c0_25, %c0_26], %55 {strides = array<i32>} : memref<1x8x128xf32, #tpu.memory_space<vmem>>, vector<1x8x128xf32>,
    return
  }
  func.func @transform_1(%arg0: i32, %arg1: i32, %arg2: memref<16xi32, #tpu.memory_space<smem>>) -> (i32, i32) {
    %c0_i32 = arith.constant 0 : i32
    %c0_i32_0 = arith.constant 0 : i32
    return %arg1, %c0_i32 : i32, i32
  }
  func.func @transform_2(%arg0: i32, %arg1: i32, %arg2: memref<16xi32, #tpu.memory_space<smem>>) -> (i32, i32) {
    %c0_i32 = arith.constant 0 : i32
    %c0_i32_0 = arith.constant 0 : i32
    %c0_i32_1 = arith.constant 0 : i32
    return %c0_i32, %c0_i32_0 : i32, i32
  }
  func.func @transform_3(%arg0: i32, %arg1: i32, %arg2: memref<16xi32, #tpu.memory_space<smem>>) -> (i32, i32) {
    %c0_i32 = arith.constant 0 : i32
    %c0_i32_0 = arith.constant 0 : i32
    %c0_i32_1 = arith.constant 0 : i32
    return %c0_i32, %c0_i32_0 : i32, i32
  }
  func.func @transform_4(%arg0: i32, %arg1: i32, %arg2: memref<16xi32, #tpu.memory_space<smem>>) -> (i32, i32, i32) {
    %c0_i32 = arith.constant 0 : i32
    %c0_i32_0 = arith.constant 0 : i32
    return %arg0, %arg1, %c0_i32 : i32, i32, i32
  }
}

</mosaic_0001>

<llo_original>
// kernel: tpu_custom_call.1
$region0: #{tpu_custom_call.1}
  #allocation0 [shape = 'u32[]', space=smem, size = 0x4, offset = 0x4, fixed_abs, tag = 'smem constant byte address 0x4 - core index']
  #allocation1 [shape = 'u32[144,128]{1,0:T(1,128)}', space=vmem, size = 0x12000, scoped, tag = 'internal scratch']
  #allocation2 [shape = 'f32[2,8,128]{2,1,0:T(8,128)}', space=vmem, size = 0x2000, scoped, tag = 'scratch operand']
  #allocation3 [shape = 's32[2]{0}', space=sflag, size = 0x8, scoped, tag = 'scratch operand']
  #allocation4 [shape = 's32[1]{0}', space=sflag, size = 0x4, scoped, tag = 'scoped memory for tpu_custom_call.1']
  #allocation5 [shape = 'u8[512]{0}', space=smem, size = 0x200, scoped, tag = 'prefetched SMEM operand 0']
  #allocation10 [shape = 's32[]', space=sflag, size = 0x4, offset = 0, fixed_abs, tag = 'sflag constant byte address 0x0 - dummy sync flag']
  #allocation11 [shape = 's32[]', space=sflag, size = 0x4, offset = 0, fixed_abs, tag = 'sflag constant byte address 0x0 - dummy sync flag']
  #allocation12 [shape = 'u32[]', space=smem, size = 0x4, offset = 0x44, fixed_abs, tag = 'smem constant byte address 0x44 - assertion arg 0']
  #allocation13 [shape = 'u32[]', space=smem, size = 0x4, offset = 0x48, fixed_abs, tag = 'smem constant byte address 0x48 - assertion arg 1']
  #allocation14 [shape = 's32[]', space=sflag, size = 0x4, offset = 0, fixed_abs, tag = 'sflag constant byte address 0x0 - dummy sync flag']
  #allocation15 [shape = 's32[]', space=sflag, size = 0x4, offset = 0, fixed_abs, tag = 'sflag constant byte address 0x0 - dummy sync flag']
  #allocation16 [shape = 's32[]', space=sflag, size = 0x4, offset = 0, fixed_abs, tag = 'sflag constant byte address 0x0 - dummy sync flag']
  #allocation17 [shape = 's32[]', space=sflag, size = 0x4, offset = 0, fixed_abs, tag = 'sflag constant byte address 0x0 - dummy sync flag']
  #allocation18 [shape = 's32[]', space=sflag, size = 0x4, offset = 0, fixed_abs, tag = 'sflag constant byte address 0x0 - dummy sync flag']
  #allocation19 [shape = 's32[]', space=sflag, size = 0x4, offset = 0, fixed_abs, tag = 'sflag constant byte address 0x0 - dummy sync flag']
  #allocation20 [shape = 's32[]', space=sflag, size = 0x4, offset = 0, fixed_abs, tag = 'sflag constant byte address 0x0 - dummy sync flag']
  #allocation21 [shape = 's32[]', space=sflag, size = 0x4, offset = 0, fixed_abs, tag = 'sflag constant byte address 0x0 - dummy sync flag']
  #allocation22 [shape = 's32[]', space=sflag, size = 0x4, offset = 0, fixed_abs, tag = 'sflag constant byte address 0x0 - dummy sync flag']
  #allocation23 [shape = 's32[]', space=sflag, size = 0x4, offset = 0, fixed_abs, tag = 'sflag constant byte address 0x0 - dummy sync flag']
  #allocation24 [shape = 's32[]', space=sflag, size = 0x4, offset = 0, fixed_abs, tag = 'sflag constant byte address 0x0 - dummy sync flag']
  #allocation25 [shape = 's32[]', space=sflag, size = 0x4, offset = 0, fixed_abs, tag = 'sflag constant byte address 0x0 - dummy sync flag']
  #allocation26 [shape = 's32[]', space=sflag, size = 0x4, offset = 0, fixed_abs, tag = 'sflag constant byte address 0x0 - dummy sync flag']
  #allocation27 [shape = 's32[]', space=sflag, size = 0x4, offset = 0, fixed_abs, tag = 'sflag constant byte address 0x0 - dummy sync flag']
  #allocation28 [shape = 's32[]', space=sflag, size = 0x4, offset = 0, fixed_abs, tag = 'sflag constant byte address 0x0 - dummy sync flag']
  #allocation29 [shape = 's32[]', space=sflag, size = 0x4, offset = 0, fixed_abs, tag = 'sflag constant byte address 0x0 - dummy sync flag']
  #allocation30 [shape = 's32[]', space=sflag, size = 0x4, offset = 0, fixed_abs, tag = 'sflag constant byte address 0x0 - dummy sync flag']
  #allocation31 [shape = 's32[]', space=sflag, size = 0x4, offset = 0, fixed_abs, tag = 'sflag constant byte address 0x0 - dummy sync flag']
  #allocation32 [shape = 's32[]', space=sflag, size = 0x4, offset = 0, fixed_abs, tag = 'sflag constant byte address 0x0 - dummy sync flag']
  #allocation33 [shape = 's32[]', space=sflag, size = 0x4, offset = 0, fixed_abs, tag = 'sflag constant byte address 0x0 - dummy sync flag']
  #allocation34 [shape = 's32[]', space=sflag, size = 0x4, offset = 0, fixed_abs, tag = 'sflag constant byte address 0x0 - dummy sync flag']
  #allocation35 [shape = 's32[]', space=sflag, size = 0x4, offset = 0, fixed_abs, tag = 'sflag constant byte address 0x0 - dummy sync flag']
  #allocation36 [shape = 's32[]', space=sflag, size = 0x4, offset = 0, fixed_abs, tag = 'sflag constant byte address 0x0 - dummy sync flag']
  #allocation37 [shape = 's32[]', space=sflag, size = 0x4, offset = 0, fixed_abs, tag = 'sflag constant byte address 0x0 - dummy sync flag']
  #allocation38 [shape = 's32[]', space=sflag, size = 0x4, offset = 0, fixed_abs, tag = 'sflag constant byte address 0x0 - dummy sync flag']
  #allocation39 [shape = 's32[]', space=sflag, size = 0x4, offset = 0, fixed_abs, tag = 'sflag constant byte address 0x0 - dummy sync flag']
  #allocation40 [shape = 's32[]', space=sflag, size = 0x4, offset = 0, fixed_abs, tag = 'sflag constant byte address 0x0 - dummy sync flag']
  #allocation41 [shape = 's32[]', space=sflag, size = 0x4, offset = 0, fixed_abs, tag = 'sflag constant byte address 0x0 - dummy sync flag']
  #allocation42 [shape = 's32[]', space=sflag, size = 0x4, offset = 0, fixed_abs, tag = 'sflag constant byte address 0x0 - dummy sync flag']
  #allocation43 [shape = 's32[]', space=sflag, size = 0x4, offset = 0, fixed_abs, tag = 'sflag constant byte address 0x0 - dummy sync flag']
  %s0 = inlined_call_operand.hbm [shape: s32[16], index: 0, kind: input, shape index: {}]
  %s1 = inlined_call_operand.hbm [shape: f32[64,128], index: 1, kind: input, shape index: {}]
  %s2 = inlined_call_operand.hbm [shape: f32[8,128], index: 2, kind: input, shape index: {}]
  %s3 = inlined_call_operand.vmem [shape: f32[1,128], index: 3, kind: input, shape index: {}]
  %s4 = inlined_call_operand.vmem [shape: f32[1,128], index: 4, kind: input, shape index: {}]
  %s5 = inlined_call_operand.hbm [shape: f32[2,8,128], index: 5, kind: output, shape index: {}]
  %s6 = sld [smem:[#allocation0]]
  $region121: #{tpu_custom_call.1} parent=0
    _
  %s8 = ssub.s32 1, %s6
  %s9 = scalar_select 0, %s8, %s6
  %11 = dma.hbm_to_smem %s0, 16, [#allocation5], [#allocation4]
  %12 = dma.done [#allocation4], 16
  %13 = sfence
  $region1: #{tpu_custom_call.1} parent=0
    #allocation6 [shape = 'u8[4096]{0}', space=vmem, size = 0x1000, scoped, tag = 'input window, operand 2, single buffered']
    #allocation7 [shape = 's32[2]{0}', space=sflag, size = 0x8, scoped, tag = 'scoped memory for tpu_custom_call.1']
    #allocation8 [shape = 's32[2]{0}', space=sflag, size = 0x8, scoped, tag = 'scoped memory for tpu_custom_call.1']
    #allocation9 [shape = 'u8[8192]{0}', space=vmem, size = 0x2000, scoped, tag = 'output window, operand 0']
    %14 = vsyncpa [#allocation7], 0
    %15 = vsyncpa [#allocation8], 0
    %s16 = scalar_lea.sflag [#allocation8], 1
    %17 = vsyncpa %s16, 0
    loop: start=0, step=1, limit=4
    $region2: #{tpu_custom_call.1} parent=1 // loop_pre_header
      _
    $region3: #{tpu_custom_call.1} parent=1 // loop_header
      %s19 = sphi 0, %s23
      %p20 = scmp.ge.s32.totalorder %s19, 4
      %s26 = sphi 0, %s38
      %s27 = sphi 0, %s34
      %s28 = sphi 0, %s26
      %s29 = sphi 0, %s27
      %s30 = sphi 0, %s28
      %s31 = sphi 0, %s29
      %s41 = sphi 0, %s43
      %s44 = sphi 0, %s41
      %s45 = sphi 0, %s44
      %s61 = sphi 0, %s45
      %s65 = sphi 0, %s65
      %s67 = sphi 0, %s65
      %s68 = sphi 0, %s67
      %s82 = sphi 0, %s68
      %s86 = sphi 0, %s86
      %s88 = sphi 0, %s86
      %s89 = sphi 0, %s88
      %s103 = sphi 0, %s89
      %s111 = sphi 0, %s113
      %s114 = sphi 0, %s111
      %s115 = sphi 0, %s114
      %s131 = sphi 0, %s115
    $region4: #{tpu_custom_call.1} parent=1 // loop_header_branch
      %22 = sbr.rel (%p20) target = $region8
    $region5: #{tpu_custom_call.1} parent=1 // loop_body
      %s24 = ssub.s32 %s19, 1
      %s25 = ssub.s32 %s19, 2
      %s32 = sadd.s32 1, %s27
      %p33 = scmp.ge.s32.totalorder %s32, 1
      %s34 = scalar_select %p33, 0, %s32
      %s35 = sadd.s32 1, %s26
      %s36 = scalar_select %p33, %s35, %s26
      %p37 = scmp.ge.s32.totalorder %s36, 2
      %s38 = scalar_select %p37, 0, %s36
      %s39 = ssub.s32 %s27, %s34
      %p40 = scmp.eq.s32.totalorder %s39, 0
      %s42 = sadd.s32 %s41, 1
      %s43 = scalar_select %p40, %s41, %s42
      %p46 = pneg %p40
      %p47 = scmp.eq.s32.totalorder %s19, 1
      %p48 = por %p46, %p47
      %p49 = scmp.ne.s32.totalorder %s41, %s44
      %p50 = scmp.eq.s32.totalorder %s19, 0
      %p51 = por %p49, %p50
      %p52 = scmp.ne.s32.totalorder %s41, %s44
      %p53 = scmp.eq.s32.totalorder %s24, 1
      %p54 = por %p52, %p53
      %p55 = scmp.ne.s32.totalorder %s44, %s45
      %p56 = scmp.eq.s32.totalorder %s24, 0
      %p57 = por %p55, %p56
      %p58 = scmp.ne.s32.totalorder %s44, %s45
      %p59 = scmp.eq.s32.totalorder %s25, 1
      %p60 = por %p58, %p59
      %p62 = scmp.ne.s32.totalorder %s45, %s61
      %p63 = scmp.eq.s32.totalorder %s25, 0
      %p64 = por %p62, %p63
      %s66 = sadd.s32 %s65, 1
      %p69 = scmp.eq.s32.totalorder %s19, 1
      %p70 = scmp.ne.s32.totalorder %s65, %s67
      %p71 = scmp.eq.s32.totalorder %s19, 0
      %p72 = por %p70, %p71
      %p73 = scmp.ne.s32.totalorder %s65, %s67
      %p74 = scmp.eq.s32.totalorder %s24, 1
      %p75 = por %p73, %p74
      %p76 = scmp.ne.s32.totalorder %s67, %s68
      %p77 = scmp.eq.s32.totalorder %s24, 0
      %p78 = por %p76, %p77
      %p79 = scmp.ne.s32.totalorder %s67, %s68
      %p80 = scmp.eq.s32.totalorder %s25, 1
      %p81 = por %p79, %p80
      %p83 = scmp.ne.s32.totalorder %s68, %s82
      %p84 = scmp.eq.s32.totalorder %s25, 0
      %p85 = por %p83, %p84
      %s87 = sadd.s32 %s86, 1
      %p90 = scmp.eq.s32.totalorder %s19, 1
      %p91 = scmp.ne.s32.totalorder %s86, %s88
      %p92 = scmp.eq.s32.totalorder %s19, 0
      %p93 = por %p91, %p92
      %p94 = scmp.ne.s32.totalorder %s86, %s88
      %p95 = scmp.eq.s32.totalorder %s24, 1
      %p96 = por %p94, %p95
      %p97 = scmp.ne.s32.totalorder %s88, %s89
      %p98 = scmp.eq.s32.totalorder %s24, 0
      %p99 = por %p97, %p98
      %p100 = scmp.ne.s32.totalorder %s88, %s89
      %p101 = scmp.eq.s32.totalorder %s25, 1
      %p102 = por %p100, %p101
      %p104 = scmp.ne.s32.totalorder %s89, %s103
      %p105 = scmp.eq.s32.totalorder %s25, 0
      %p106 = por %p104, %p105
      %s107 = ssub.s32 %s26, %s38
      %s108 = ssub.s32 %s27, %s34
      %s109 = sor.u32 %s107, %s108
      %p110 = scmp.eq.s32.totalorder %s109, 0
      %s112 = sadd.s32 %s111, 1
      %s113 = scalar_select %p110, %s111, %s112
      %p116 = pneg %p110
      %p117 = scmp.eq.s32.totalorder %s19, 1
      %p118 = por %p116, %p117
      %p119 = scmp.ne.s32.totalorder %s111, %s114
      %p120 = scmp.eq.s32.totalorder %s19, 0
      %p121 = por %p119, %p120
      %p122 = scmp.ne.s32.totalorder %s111, %s114
      %p123 = scmp.eq.s32.totalorder %s24, 1
      %p124 = por %p122, %p123
      %p125 = scmp.ne.s32.totalorder %s114, %s115
      %p126 = scmp.eq.s32.totalorder %s24, 0
      %p127 = por %p125, %p126
      %p128 = scmp.ne.s32.totalorder %s114, %s115
      %p129 = scmp.eq.s32.totalorder %s25, 1
      %p130 = por %p128, %p129
      %p132 = scmp.ne.s32.totalorder %s115, %s131
      %p133 = scmp.eq.s32.totalorder %s25, 0
      %p134 = por %p132, %p133
      %p135 = scmp.le.s32.totalorder 1, %s19
      %p136 = scmp.lt.s32.totalorder %s19, 3
      %p137 = pnand %p135, %p136
      %p138 = pneg %p137
      // Predicated region
      $region9: #{tpu_custom_call.1} parent=5 // pred_check
        _
      $region10: #{tpu_custom_call.1} parent=5 // pred_check_branch
        %140 = sbr.rel (%p137) target = $region12
      $region11: #{tpu_custom_call.1} parent=5 // pred_region
        %s141 = ssub.s32 %s19, 1
        // Predicated region
        $region13: #{tpu_custom_call.1} parent=11 // pred_check
          %p142 = pneg %p57
        $region14: #{tpu_custom_call.1} parent=11 // pred_check_branch
          %144 = sbr.rel (%p142) target = $region16
        $region15: #{tpu_custom_call.1} parent=11 // pred_region
          %s146 = ssub.s32 128, 128
          %147 = vsyncadd [#allocation7], %s146
          %s148 = smul.addr %s29, 128
          %s149 = scalar_lea.hbm %s2, %s148
          %s151 = sshll.u32 [#allocation6], 4
          %s152 = int_to_ptr.vmem [resolvable:$true] %s151
          %154 = dma.hbm_to_vmem [thread:$0]  %s149, 128, %s152, [#allocation7]
        $region16: #{tpu_custom_call.1} parent=11 // pred_fallthru
          _
        // Predicated region
        $region17: #{tpu_custom_call.1} parent=11 // pred_check
          %p155 = pneg %p78
        $region18: #{tpu_custom_call.1} parent=11 // pred_check_branch
          %157 = sbr.rel (%p155) target = $region20
        $region19: #{tpu_custom_call.1} parent=11 // pred_region
          _
        $region20: #{tpu_custom_call.1} parent=11 // pred_fallthru
          _
        // Predicated region
        $region21: #{tpu_custom_call.1} parent=11 // pred_check
          %p158 = pneg %p99
        $region22: #{tpu_custom_call.1} parent=11 // pred_check_branch
          %160 = sbr.rel (%p158) target = $region24
        $region23: #{tpu_custom_call.1} parent=11 // pred_region
          _
        $region24: #{tpu_custom_call.1} parent=11 // pred_fallthru
          _
      $region12: #{tpu_custom_call.1} parent=5 // pred_fallthru
        _
      %p161 = scmp.lt.s32.totalorder %s19, 2
      // Predicated region
      $region25: #{tpu_custom_call.1} parent=5 // pred_check
        %p162 = pneg %p161
      $region26: #{tpu_custom_call.1} parent=5 // pred_check_branch
        %164 = sbr.rel (%p162) target = $region28
      $region27: #{tpu_custom_call.1} parent=5 // pred_region
        _
      $region28: #{tpu_custom_call.1} parent=5 // pred_fallthru
        _
      %p165 = scmp.le.s32.totalorder 1, %s19
      %p166 = scmp.lt.s32.totalorder %s19, 3
      %p167 = pnand %p165, %p166
      %p168 = pneg %p167
      // Predicated region
      $region29: #{tpu_custom_call.1} parent=5 // pred_check
        _
      $region30: #{tpu_custom_call.1} parent=5 // pred_check_branch
        %170 = sbr.rel (%p167) target = $region32
      $region31: #{tpu_custom_call.1} parent=5 // pred_region
        %s171 = ssub.s32 %s19, 1
        // Predicated region
        $region33: #{tpu_custom_call.1} parent=31 // pred_check
          %p172 = pneg %p57
        $region34: #{tpu_custom_call.1} parent=31 // pred_check_branch
          %174 = sbr.rel (%p172) target = $region36
        $region35: #{tpu_custom_call.1} parent=31 // pred_region
          %175 = dma.done [#allocation7], 128
        $region36: #{tpu_custom_call.1} parent=31 // pred_fallthru
          _
        %p176 = pneg %p57
        %p177 = pneg %p54
        %p178 = pneg %p78
        %p179 = pneg %p75
        %p180 = pneg %p99
        %p181 = pneg %p96
        %p182 = pneg %p127
        %p183 = pneg %p124
        %s184 = sand.u32 %s114, 1
        %s185 = scalar_lea.sflag [#allocation8], %s184
        %s186 = sand.u32 %s114, 1
        %s187 = smul.addr %s186, 8
        %s188 = scalar_lea.vmem [#allocation9], %s187
        %p189 = scmp.eq.s32.totalorder %s29, 0
        // Predicated region
        $region37: #{tpu_custom_call.1} parent=31 // pred_check
          %p190 = pneg %p189
        $region38: #{tpu_custom_call.1} parent=31 // pred_check_branch
          %192 = sbr.rel (%p190) target = $region40
        $region39: #{tpu_custom_call.1} parent=31 // pred_region
          %s193 = smul.u32 %s28, 8
          %s194 = sld [smem:[#allocation5 + %s193]]
          %s195 = smul.addr %s194, 16
          %s196 = scalar_lea.hbm %s1, %s195
          // Predicated region
          $region41: #{tpu_custom_call.1} parent=39 // pred_check
            _
          $region42: #{tpu_custom_call.1} parent=39 // pred_check_branch
            %198 = sbr.rel target = $region44
          $region43: #{tpu_custom_call.1} parent=39 // pred_region
            %199 = sst [smem:[#allocation12]] [#allocation11]
            %200 = sst [smem:[#allocation13]] [#allocation10]
          $region44: #{tpu_custom_call.1} parent=39 // pred_fallthru
            _
          %202 = shalt.err (0)
          %s204 = sshll.u32 [#allocation2], 4
          %s205 = int_to_ptr.vmem [resolvable:$true] %s204
          %207 = dma.hbm_to_vmem [thread:$0]  %s196, 16, %s205, [#allocation3]
          %s208 = sadd.s32 %s193, 1
          %s209 = sld [smem:[#allocation5 + %s208]]
          %s210 = smul.addr %s209, 16
          %s211 = scalar_lea.hbm %s1, %s210
          %s212 = scalar_lea.vmem [#allocation2], 1
          // Predicated region
          $region45: #{tpu_custom_call.1} parent=39 // pred_check
            _
          $region46: #{tpu_custom_call.1} parent=39 // pred_check_branch
            %214 = sbr.rel target = $region48
          $region47: #{tpu_custom_call.1} parent=39 // pred_region
            %215 = sst [smem:[#allocation12]] [#allocation15]
            %216 = sst [smem:[#allocation13]] [#allocation14]
          $region48: #{tpu_custom_call.1} parent=39 // pred_fallthru
            _
          %218 = shalt.err (0)
          %s220 = sshll.u32 %s212, 4
          %s221 = int_to_ptr.vmem [resolvable:$true] %s220
          %223 = dma.hbm_to_vmem [thread:$0]  %s211, 16, %s221, [#allocation3]
          %s224 = sadd.s32 %s193, 2
          %s225 = sld [smem:[#allocation5 + %s224]]
          %s226 = smul.addr %s225, 16
          %s227 = scalar_lea.hbm %s1, %s226
          %s228 = scalar_lea.vmem [#allocation2], 2
          // Predicated region
          $region49: #{tpu_custom_call.1} parent=39 // pred_check
            _
          $region50: #{tpu_custom_call.1} parent=39 // pred_check_branch
            %230 = sbr.rel target = $region52
          $region51: #{tpu_custom_call.1} parent=39 // pred_region
            %231 = sst [smem:[#allocation12]] [#allocation17]
            %232 = sst [smem:[#allocation13]] [#allocation16]
          $region52: #{tpu_custom_call.1} parent=39 // pred_fallthru
            _
          %234 = shalt.err (0)
          %s236 = sshll.u32 %s228, 4
          %s237 = int_to_ptr.vmem [resolvable:$true] %s236
          %239 = dma.hbm_to_vmem [thread:$0]  %s227, 16, %s237, [#allocation3]
          %s240 = sadd.s32 %s193, 3
          %s241 = sld [smem:[#allocation5 + %s240]]
          %s242 = smul.addr %s241, 16
          %s243 = scalar_lea.hbm %s1, %s242
          %s244 = scalar_lea.vmem [#allocation2], 3
          // Predicated region
          $region53: #{tpu_custom_call.1} parent=39 // pred_check
            _
          $region54: #{tpu_custom_call.1} parent=39 // pred_check_branch
            %246 = sbr.rel target = $region56
          $region55: #{tpu_custom_call.1} parent=39 // pred_region
            %247 = sst [smem:[#allocation12]] [#allocation19]
            %248 = sst [smem:[#allocation13]] [#allocation18]
          $region56: #{tpu_custom_call.1} parent=39 // pred_fallthru
            _
          %250 = shalt.err (0)
          %s252 = sshll.u32 %s244, 4
          %s253 = int_to_ptr.vmem [resolvable:$true] %s252
          %255 = dma.hbm_to_vmem [thread:$0]  %s243, 16, %s253, [#allocation3]
          %s256 = sadd.s32 %s193, 4
          %s257 = sld [smem:[#allocation5 + %s256]]
          %s258 = smul.addr %s257, 16
          %s259 = scalar_lea.hbm %s1, %s258
          %s260 = scalar_lea.vmem [#allocation2], 4
          // Predicated region
          $region57: #{tpu_custom_call.1} parent=39 // pred_check
            _
          $region58: #{tpu_custom_call.1} parent=39 // pred_check_branch
            %262 = sbr.rel target = $region60
          $region59: #{tpu_custom_call.1} parent=39 // pred_region
            %263 = sst [smem:[#allocation12]] [#allocation21]
            %264 = sst [smem:[#allocation13]] [#allocation20]
          $region60: #{tpu_custom_call.1} parent=39 // pred_fallthru
            _
          %266 = shalt.err (0)
          %s268 = sshll.u32 %s260, 4
          %s269 = int_to_ptr.vmem [resolvable:$true] %s268
          %271 = dma.hbm_to_vmem [thread:$0]  %s259, 16, %s269, [#allocation3]
          %s272 = sadd.s32 %s193, 5
          %s273 = sld [smem:[#allocation5 + %s272]]
          %s274 = smul.addr %s273, 16
          %s275 = scalar_lea.hbm %s1, %s274
          %s276 = scalar_lea.vmem [#allocation2], 5
          // Predicated region
          $region61: #{tpu_custom_call.1} parent=39 // pred_check
            _
          $region62: #{tpu_custom_call.1} parent=39 // pred_check_branch
            %278 = sbr.rel target = $region64
          $region63: #{tpu_custom_call.1} parent=39 // pred_region
            %279 = sst [smem:[#allocation12]] [#allocation23]
            %280 = sst [smem:[#allocation13]] [#allocation22]
          $region64: #{tpu_custom_call.1} parent=39 // pred_fallthru
            _
          %282 = shalt.err (0)
          %s284 = sshll.u32 %s276, 4
          %s285 = int_to_ptr.vmem [resolvable:$true] %s284
          %287 = dma.hbm_to_vmem [thread:$0]  %s275, 16, %s285, [#allocation3]
          %s288 = sadd.s32 %s193, 6
          %s289 = sld [smem:[#allocation5 + %s288]]
          %s290 = smul.addr %s289, 16
          %s291 = scalar_lea.hbm %s1, %s290
          %s292 = scalar_lea.vmem [#allocation2], 6
          // Predicated region
          $region65: #{tpu_custom_call.1} parent=39 // pred_check
            _
          $region66: #{tpu_custom_call.1} parent=39 // pred_check_branch
            %294 = sbr.rel target = $region68
          $region67: #{tpu_custom_call.1} parent=39 // pred_region
            %295 = sst [smem:[#allocation12]] [#allocation25]
            %296 = sst [smem:[#allocation13]] [#allocation24]
          $region68: #{tpu_custom_call.1} parent=39 // pred_fallthru
            _
          %298 = shalt.err (0)
          %s300 = sshll.u32 %s292, 4
          %s301 = int_to_ptr.vmem [resolvable:$true] %s300
          %303 = dma.hbm_to_vmem [thread:$0]  %s291, 16, %s301, [#allocation3]
          %s304 = sadd.s32 %s193, 7
          %s305 = sld [smem:[#allocation5 + %s304]]
          %s306 = smul.addr %s305, 16
          %s307 = scalar_lea.hbm %s1, %s306
          %s308 = scalar_lea.vmem [#allocation2], 7
          // Predicated region
          $region69: #{tpu_custom_call.1} parent=39 // pred_check
            _
          $region70: #{tpu_custom_call.1} parent=39 // pred_check_branch
            %310 = sbr.rel target = $region72
          $region71: #{tpu_custom_call.1} parent=39 // pred_region
            %311 = sst [smem:[#allocation12]] [#allocation27]
            %312 = sst [smem:[#allocation13]] [#allocation26]
          $region72: #{tpu_custom_call.1} parent=39 // pred_fallthru
            _
          %314 = shalt.err (0)
          %s316 = sshll.u32 %s308, 4
          %s317 = int_to_ptr.vmem [resolvable:$true] %s316
          %319 = dma.hbm_to_vmem [thread:$0]  %s307, 16, %s317, [#allocation3]
        $region40: #{tpu_custom_call.1} parent=31 // pred_fallthru
          _
        %s320 = sadd.s32 %s29, 1
        %p321 = scmp.lt.s32.totalorder %s320, 1
        // Predicated region
        $region73: #{tpu_custom_call.1} parent=31 // pred_check
          %p322 = pneg %p321
        $region74: #{tpu_custom_call.1} parent=31 // pred_check_branch
          %324 = sbr.rel (%p322) target = $region76
        $region75: #{tpu_custom_call.1} parent=31 // pred_region
          %p325 = scmp.lt.s32.totalorder %s320, 0
          %s326 = ssub.s32 0, %s320
          %s327 = scalar_select %p325, %s326, %s320
          %s328 = sand.u32 %s327, 1
          %s329 = ssub.s32 0, %s328
          %s330 = scalar_select %p325, %s329, %s328
          %p331 = scmp.ne.s32.totalorder %s330, 0
          %p332 = scmp.lt.s32.totalorder %s330, 0
          %p333 = pnand %p332, %p331
          %p334 = pneg %p333
          %s335 = sadd.s32 %s330, 2
          %s336 = scalar_select %p334, %s335, %s330
          %s337 = smul.u32 %s28, 8
          %s338 = smul.u32 %s320, 8
          %s339 = sadd.s32 %s337, %s338
          %s340 = sld [smem:[#allocation5 + %s339]]
          %s341 = smul.addr %s340, 16
          %s342 = scalar_lea.hbm %s1, %s341
          %s343 = smul.u32 %s336, 8
          %s344 = scalar_lea.vmem [#allocation2], %s343
          %s345 = scalar_lea.sflag [#allocation3], %s336
          // Predicated region
          $region77: #{tpu_custom_call.1} parent=75 // pred_check
            _
          $region78: #{tpu_custom_call.1} parent=75 // pred_check_branch
            %347 = sbr.rel target = $region80
          $region79: #{tpu_custom_call.1} parent=75 // pred_region
            %348 = sst [smem:[#allocation12]] [#allocation29]
            %349 = sst [smem:[#allocation13]] [#allocation28]
          $region80: #{tpu_custom_call.1} parent=75 // pred_fallthru
            _
          %351 = shalt.err (0)
          %s353 = sshll.u32 %s344, 4
          %s354 = int_to_ptr.vmem [resolvable:$true] %s353
          %356 = dma.hbm_to_vmem [thread:$0]  %s342, 16, %s354, %s345
          %s357 = sadd.s32 %s339, 1
          %s358 = sld [smem:[#allocation5 + %s357]]
          %s359 = smul.addr %s358, 16
          %s360 = scalar_lea.hbm %s1, %s359
          %s361 = sadd.s32 1, %s343
          %s362 = scalar_lea.vmem [#allocation2], %s361
          // Predicated region
          $region81: #{tpu_custom_call.1} parent=75 // pred_check
            _
          $region82: #{tpu_custom_call.1} parent=75 // pred_check_branch
            %364 = sbr.rel target = $region84
          $region83: #{tpu_custom_call.1} parent=75 // pred_region
            %365 = sst [smem:[#allocation12]] [#allocation31]
            %366 = sst [smem:[#allocation13]] [#allocation30]
          $region84: #{tpu_custom_call.1} parent=75 // pred_fallthru
            _
          %368 = shalt.err (0)
          %s370 = sshll.u32 %s362, 4
          %s371 = int_to_ptr.vmem [resolvable:$true] %s370
          %373 = dma.hbm_to_vmem [thread:$0]  %s360, 16, %s371, %s345
          %s374 = sadd.s32 %s339, 2
          %s375 = sld [smem:[#allocation5 + %s374]]
          %s376 = smul.addr %s375, 16
          %s377 = scalar_lea.hbm %s1, %s376
          %s378 = sadd.s32 2, %s343
          %s379 = scalar_lea.vmem [#allocation2], %s378
          // Predicated region
          $region85: #{tpu_custom_call.1} parent=75 // pred_check
            _
          $region86: #{tpu_custom_call.1} parent=75 // pred_check_branch
            %381 = sbr.rel target = $region88
          $region87: #{tpu_custom_call.1} parent=75 // pred_region
            %382 = sst [smem:[#allocation12]] [#allocation33]
            %383 = sst [smem:[#allocation13]] [#allocation32]
          $region88: #{tpu_custom_call.1} parent=75 // pred_fallthru
            _
          %385 = shalt.err (0)
          %s387 = sshll.u32 %s379, 4
          %s388 = int_to_ptr.vmem [resolvable:$true] %s387
          %390 = dma.hbm_to_vmem [thread:$0]  %s377, 16, %s388, %s345
          %s391 = sadd.s32 %s339, 3
          %s392 = sld [smem:[#allocation5 + %s391]]
          %s393 = smul.addr %s392, 16
          %s394 = scalar_lea.hbm %s1, %s393
          %s395 = sadd.s32 3, %s343
          %s396 = scalar_lea.vmem [#allocation2], %s395
          // Predicated region
          $region89: #{tpu_custom_call.1} parent=75 // pred_check
            _
          $region90: #{tpu_custom_call.1} parent=75 // pred_check_branch
            %398 = sbr.rel target = $region92
          $region91: #{tpu_custom_call.1} parent=75 // pred_region
            %399 = sst [smem:[#allocation12]] [#allocation35]
            %400 = sst [smem:[#allocation13]] [#allocation34]
          $region92: #{tpu_custom_call.1} parent=75 // pred_fallthru
            _
          %402 = shalt.err (0)
          %s404 = sshll.u32 %s396, 4
          %s405 = int_to_ptr.vmem [resolvable:$true] %s404
          %407 = dma.hbm_to_vmem [thread:$0]  %s394, 16, %s405, %s345
          %s408 = sadd.s32 %s339, 4
          %s409 = sld [smem:[#allocation5 + %s408]]
          %s410 = smul.addr %s409, 16
          %s411 = scalar_lea.hbm %s1, %s410
          %s412 = sadd.s32 4, %s343
          %s413 = scalar_lea.vmem [#allocation2], %s412
          // Predicated region
          $region93: #{tpu_custom_call.1} parent=75 // pred_check
            _
          $region94: #{tpu_custom_call.1} parent=75 // pred_check_branch
            %415 = sbr.rel target = $region96
          $region95: #{tpu_custom_call.1} parent=75 // pred_region
            %416 = sst [smem:[#allocation12]] [#allocation37]
            %417 = sst [smem:[#allocation13]] [#allocation36]
          $region96: #{tpu_custom_call.1} parent=75 // pred_fallthru
            _
          %419 = shalt.err (0)
          %s421 = sshll.u32 %s413, 4
          %s422 = int_to_ptr.vmem [resolvable:$true] %s421
          %424 = dma.hbm_to_vmem [thread:$0]  %s411, 16, %s422, %s345
          %s425 = sadd.s32 %s339, 5
          %s426 = sld [smem:[#allocation5 + %s425]]
          %s427 = smul.addr %s426, 16
          %s428 = scalar_lea.hbm %s1, %s427
          %s429 = sadd.s32 5, %s343
          %s430 = scalar_lea.vmem [#allocation2], %s429
          // Predicated region
          $region97: #{tpu_custom_call.1} parent=75 // pred_check
            _
          $region98: #{tpu_custom_call.1} parent=75 // pred_check_branch
            %432 = sbr.rel target = $region100
          $region99: #{tpu_custom_call.1} parent=75 // pred_region
            %433 = sst [smem:[#allocation12]] [#allocation39]
            %434 = sst [smem:[#allocation13]] [#allocation38]
          $region100: #{tpu_custom_call.1} parent=75 // pred_fallthru
            _
          %436 = shalt.err (0)
          %s438 = sshll.u32 %s430, 4
          %s439 = int_to_ptr.vmem [resolvable:$true] %s438
          %441 = dma.hbm_to_vmem [thread:$0]  %s428, 16, %s439, %s345
          %s442 = sadd.s32 %s339, 6
          %s443 = sld [smem:[#allocation5 + %s442]]
          %s444 = smul.addr %s443, 16
          %s445 = scalar_lea.hbm %s1, %s444
          %s446 = sadd.s32 6, %s343
          %s447 = scalar_lea.vmem [#allocation2], %s446
          // Predicated region
          $region101: #{tpu_custom_call.1} parent=75 // pred_check
            _
          $region102: #{tpu_custom_call.1} parent=75 // pred_check_branch
            %449 = sbr.rel target = $region104
          $region103: #{tpu_custom_call.1} parent=75 // pred_region
            %450 = sst [smem:[#allocation12]] [#allocation41]
            %451 = sst [smem:[#allocation13]] [#allocation40]
          $region104: #{tpu_custom_call.1} parent=75 // pred_fallthru
            _
          %453 = shalt.err (0)
          %s455 = sshll.u32 %s447, 4
          %s456 = int_to_ptr.vmem [resolvable:$true] %s455
          %458 = dma.hbm_to_vmem [thread:$0]  %s445, 16, %s456, %s345
          %s459 = sadd.s32 %s339, 7
          %s460 = sld [smem:[#allocation5 + %s459]]
          %s461 = smul.addr %s460, 16
          %s462 = scalar_lea.hbm %s1, %s461
          %s463 = sadd.s32 7, %s343
          %s464 = scalar_lea.vmem [#allocation2], %s463
          // Predicated region
          $region105: #{tpu_custom_call.1} parent=75 // pred_check
            _
          $region106: #{tpu_custom_call.1} parent=75 // pred_check_branch
            %466 = sbr.rel target = $region108
          $region107: #{tpu_custom_call.1} parent=75 // pred_region
            %467 = sst [smem:[#allocation12]] [#allocation43]
            %468 = sst [smem:[#allocation13]] [#allocation42]
          $region108: #{tpu_custom_call.1} parent=75 // pred_fallthru
            _
          %470 = shalt.err (0)
          %s472 = sshll.u32 %s464, 4
          %s473 = int_to_ptr.vmem [resolvable:$true] %s472
          %475 = dma.hbm_to_vmem [thread:$0]  %s462, 16, %s473, %s345
        $region76: #{tpu_custom_call.1} parent=31 // pred_fallthru
          _
        %p476 = scmp.lt.s32.totalorder %s29, 0
        %s477 = ssub.s32 0, %s29
        %s478 = scalar_select %p476, %s477, %s29
        %s479 = sand.u32 %s478, 1
        %s480 = ssub.s32 0, %s479
        %s481 = scalar_select %p476, %s480, %s479
        %p482 = scmp.ne.s32.totalorder %s481, 0
        %p483 = scmp.lt.s32.totalorder %s481, 0
        %p484 = pnand %p483, %p482
        %p485 = pneg %p484
        %s486 = sadd.s32 %s481, 2
        %s487 = scalar_select %p485, %s486, %s481
        %s488 = smul.u32 %s487, 8
        %s489 = scalar_lea.vmem [#allocation2], %s488
        %s490 = scalar_lea.sflag [#allocation3], %s487
        %s491 = smul.u32 8, 1
        %s492 = sshll.u32 %s491, 4
        %493 = dma.done %s490, %s492
        %v494 = vld [vmem:[%s489] sm:$0xff]
        %v495 = vld [vmem:[#allocation6] sm:$0xff]
        %v496 = vadd.f32 %v494, %v495
        %497 = vadd.xlane.f32.xlu0 %v496
        %v498 = vpop.xlane.xlu0 %497
        %v499 = vrcp.pop 128.0
        %v500 = vmul.f32 %v498, %v499
        %v501 = vmul.f32 %v496, %v496
        %502 = vadd.xlane.f32.xlu0 %v501
        %v503 = vpop.xlane.xlu0 %502
        %v504 = vmul.f32 %v503, %v499
        %v505 = vmul.f32 %v500, %v500
        %v506 = vsub.f32 %v504, %v505
        %v507 = vmax.f32 %v506, 0.0
        %v508 = vadd.f32 %v507, 1e-05
        %v509 = vrsqrt.pop %v508
        %v510 = vld [vmem:[%s3] sm:$0x1]
        %v511 = vld [vmem:[%s4] sm:$0x1]
        %v512 = vsub.f32 %v496, %v500
        %v513 = vmul.f32 %v512, %v509
        %v515 = vlaneseq
        %v516 = vshrl.u32 %v515, 7
        %v517 = vsub.s32 0, %v516
        %v518 = vrot.slane %v510, %v517
        %v520 = vmul.f32 %v513, %v518
        %v522 = vlaneseq
        %v523 = vshrl.u32 %v522, 7
        %v524 = vsub.s32 0, %v523
        %v525 = vrot.slane %v511, %v524
        %v527 = vadd.f32 %v520, %v525
        %528 = vst [vmem:[%s188] sm:$0xff] %v527
        %s529 = sand.u32 %s114, 1
        %s530 = scalar_lea.sflag [#allocation8], %s529
        %s531 = sand.u32 %s114, 1
        %s532 = smul.addr %s531, 8
        %s533 = scalar_lea.vmem [#allocation9], %s532
        // Predicated region
        $region109: #{tpu_custom_call.1} parent=31 // pred_check
          %p534 = pneg %p124
        $region110: #{tpu_custom_call.1} parent=31 // pred_check_branch
          %536 = sbr.rel (%p534) target = $region112
        $region111: #{tpu_custom_call.1} parent=31 // pred_region
          %s538 = ssub.s32 128, 128
          %539 = vsyncadd %s530, %s538
          %s540 = sadd.s32 %s29, %s28
          %s541 = smul.addr %s540, 128
          %s542 = scalar_lea.hbm %s5, %s541
          %s544 = sshll.u32 %s533, 4
          %s545 = int_to_ptr.vmem [resolvable:$true] %s544
          %547 = dma.vmem_to_hbm [thread:$0]  %s545, 128, %s542, %s530
        $region112: #{tpu_custom_call.1} parent=31 // pred_fallthru
          _
      $region32: #{tpu_custom_call.1} parent=5 // pred_fallthru
        _
      %p548 = scmp.le.s32.totalorder 2, %s19
      // Predicated region
      $region113: #{tpu_custom_call.1} parent=5 // pred_check
        %p549 = pneg %p548
      $region114: #{tpu_custom_call.1} parent=5 // pred_check_branch
        %551 = sbr.rel (%p549) target = $region116
      $region115: #{tpu_custom_call.1} parent=5 // pred_region
        %s552 = ssub.s32 %s19, 2
        // Predicated region
        $region117: #{tpu_custom_call.1} parent=115 // pred_check
          %p553 = pneg %p130
        $region118: #{tpu_custom_call.1} parent=115 // pred_check_branch
          %555 = sbr.rel (%p553) target = $region120
        $region119: #{tpu_custom_call.1} parent=115 // pred_region
          %s556 = sand.u32 %s115, 1
          %s557 = scalar_lea.sflag [#allocation8], %s556
          %s558 = sand.u32 %s115, 1
          %s559 = smul.addr %s558, 8
          %s560 = scalar_lea.vmem [#allocation9], %s559
          %561 = dma.done %s557, 128
        $region120: #{tpu_custom_call.1} parent=115 // pred_fallthru
          _
      $region116: #{tpu_custom_call.1} parent=5 // pred_fallthru
        _
    $region6: #{tpu_custom_call.1} parent=1 // loop_footer
      %s23 = sadd.s32 1, %s19
    $region7: #{tpu_custom_call.1} parent=1 // loop_footer_branch
      %18 = sbr.rel target = $region3
    $region8: #{tpu_custom_call.1} parent=1 // loop_exit
      _
    %562 = vsyncpa [#allocation7], 1
    %s563 = scalar_lea.sflag [#allocation7], 1
    %564 = vsyncpa %s563, 1
    %565 = vsyncpa [#allocation8], 1
    %s566 = scalar_lea.sflag [#allocation8], 1
    %567 = vsyncpa %s566, 1
  %568 = vsyncmov [#allocation3]
  %s569 = vpop.sfrf %568
  %p570 = scmp.eq.s32.totalorder %s569, 0
  %p571 = pneg %p570
  %573 = shalt.err (%p571)
  %s574 = scalar_lea.sflag [#allocation3], 1
  %575 = vsyncmov %s574
  %s576 = vpop.sfrf %575
  %p577 = scmp.eq.s32.totalorder %s576, 0
  %p578 = pneg %p577
  %580 = shalt.err (%p578)

</llo_original>
